<compile_context>
chip_gen: v7x
topology: tpu7x:2x2x1
jax: 0.10.0
libtpu: 0.0.40
codegen_flags: <defaults>
</compile_context>

<pallas_src>
import functools

import jax
import jax.numpy as jnp
from jax.experimental import pallas as pl
from jax.experimental.pallas import tpu as pltpu


def _round_up(x, m):
    return (x + m - 1) // m * m


def _patch_embed_kernel(w_ref, x_ref, mask_ref, o_ref, cols_ref, *,
                        cin, w_img, tm, num_m):
    """One (Cout, K) @ (K, TM) matmul per grid step; im2col built on the fly.

    w_ref:    (Cout, K)   compute-dtype weight, resident across all grid steps
    x_ref:    (Cin, Mp)   H-padded, flattened image (resident across the spatial axis)
    mask_ref: (2, TM)     f32 border masks: row 0 kills dx=0 taps at x==0,
                          row 1 kills dx=2 taps at x==W-1
    o_ref:    (Cout, TM)  lane-dense output tile (NCHW order, flattened spatial)
    cols_ref: (K, TM)     f32 VMEM scratch holding the im2col tile
    """
    if num_m == 1:
        base = 0                                              # fully static path
    else:
        base = pl.multiple_of(pl.program_id(1) * tm, 128)     # 128-aligned dynamic base

    mask_l = mask_ref[0:1, :]
    mask_r = mask_ref[1:2, :]

    for dy in range(3):
        for dx in range(3):
            # cols[(dy,dx,ci), m] = xf[ci, m + dy*W + dx]  -> contiguous lane slice.
            piece = x_ref[:, pl.ds(base + dy * w_img + dx, tm)].astype(jnp.float32)
            if dx == 0:
                piece = piece * mask_l
            elif dx == 2:
                piece = piece * mask_r
            k0 = (dy * 3 + dx) * cin
            cols_ref[k0:k0 + cin, :] = piece                  # (Cin, TM) rows of im2col

    o_ref[...] = jnp.dot(
        w_ref[...], cols_ref[...].astype(w_ref.dtype),
        preferred_element_type=jnp.float32,
    ).astype(o_ref.dtype)


def overlap_patch_embed(x_nchw, weight_oihw, *,
                        compute_dtype=jnp.bfloat16,
                        out_dtype=None,
                        tm_cap=2048):
    """nn.Conv2d(in_c, embed_dim, kernel_size=3, stride=1, padding=1, bias=False).

    Args:
      x_nchw:      (N, Cin, H, W)    NCHW input.
      weight_oihw: (Cout, Cin, 3, 3) PyTorch conv weight layout.
    Returns:
      (N, Cout, H, W) NCHW output.
    """
    N, Cin, H, W = x_nchw.shape
    Cout = weight_oihw.shape[0]
    K = 9 * Cin
    M = H * W
    out_dtype = x_nchw.dtype if out_dtype is None else out_dtype
    ib = jnp.dtype(compute_dtype).itemsize
    ob = jnp.dtype(out_dtype).itemsize

    # ---- spatial tile: multiple of 128, VMEM-budget aware, minimal padding waste ----
    m_ceil = _round_up(M, 128)
    per_lane = 2 * Cout * ob + 2 * 2 * 4 + K * 4          # out(x2) + masks(x2,f32) + scratch(f32)
    tm_budget = max(128, ((8 * 1024 * 1024) // per_lane) // 128 * 128)
    limit = max(128, min(tm_cap, tm_budget, m_ceil))
    tm, best_waste = 128, _round_up(M, 128) - M
    for t in range(128, limit + 1, 128):
        waste = _round_up(M, t) - M
        if waste <= best_waste:                            # prefer larger TM on ties
            tm, best_waste = t, waste
    m_pad = _round_up(M, tm)
    num_m = m_pad // tm

    # ---- flat, H-only-padded input row:  xf[n, ci, 1 + p] = x_padH[n, ci, p // W, p % W] ----
    mp = _round_up(m_pad + 2 * W + 2, 128)                 # covers max tap offset 2W+2
    x_padh = jnp.pad(x_nchw, ((0, 0), (0, 0), (1, 1), (0, 0)))             # (N, Cin, H+2, W)
    xflat = x_padh.reshape(N, Cin, (H + 2) * W).astype(compute_dtype)
    xf = jnp.pad(xflat, ((0, 0), (0, 0), (1, mp - 1 - (H + 2) * W)))       # (N, Cin, Mp)

    # ---- weight -> (Cout, 9*Cin), K ordered (dy, dx, cin) ----
    w_t = jnp.transpose(weight_oihw, (0, 2, 3, 1)).reshape(Cout, K).astype(compute_dtype)

    # ---- left/right border masks over the flattened spatial axis ----
    col = jnp.arange(m_pad, dtype=jnp.int32) % W
    masks = jnp.stack([(col != 0), (col != W - 1)]).astype(jnp.float32)    # (2, m_pad)

    kernel = functools.partial(_patch_embed_kernel, cin=Cin, w_img=W, tm=tm, num_m=num_m)

    flops = 2 * N * m_pad * K * Cout
    bytes_accessed = N * Cin * mp * ib + Cout * K * ib + 2 * m_pad * 4 + N * Cout * m_pad * ob
    vmem_need = (2 * Cin * mp + 2 * Cout * K) * ib + 2 * 2 * tm * 4 \
        + 2 * Cout * tm * ob + K * tm * 4
    vmem_limit = int(min(48 * 1024 * 1024, max(16 * 1024 * 1024, 2 * vmem_need)))

    out = pl.pallas_call(
        kernel,
        out_shape=jax.ShapeDtypeStruct((N, Cout, m_pad), out_dtype),
        grid_spec=pltpu.PrefetchScalarGridSpec(
            num_scalar_prefetch=0,
            grid=(N, num_m),
            in_specs=[
                # Resident im2col weight (tiny).
                pl.BlockSpec((Cout, K), lambda n, m: (0, 0)),
                # Whole padded image for batch n; constant over the spatial axis -> DMA'd
                # from HBM once per image (input traffic ~1x).  Batch dim squeezed.
                pl.BlockSpec((None, Cin, mp), lambda n, m: (n, 0, 0)),
                # Border masks, tiled with the output.
                pl.BlockSpec((2, tm), lambda n, m: (0, m)),
            ],
            # Lane-dense output strip (last dim is a multiple of 128), already NCHW order.
            out_specs=pl.BlockSpec((None, Cout, tm), lambda n, m: (n, 0, m)),
            scratch_shapes=[pltpu.VMEM((K, tm), jnp.float32)],
        ),
        compiler_params=pltpu.CompilerParams(
            dimension_semantics=("parallel", "parallel"),
            vmem_limit_bytes=vmem_limit,
        ),
        cost_estimate=pl.CostEstimate(
            flops=flops, transcendentals=0, bytes_accessed=bytes_accessed),
    )(w_t, xf, masks)

    if m_pad != M:
        out = out[:, :, :M]
    return out.reshape(N, Cout, H, W)


def _reference_conv(x_nchw, weight_oihw):
    # Pure-JAX reference (XLA conv) for correctness checking.
    return jax.lax.conv_general_dilated(
        x_nchw, weight_oihw,
        window_strides=(1, 1),
        padding=((1, 1), (1, 1)),
        dimension_numbers=("NCHW", "OIHW", "NCHW"),
    )


if __name__ == "__main__":
    # Shapes consistent with the module defaults: in_c=3, embed_dim=48, spatial=16, batch=2.
    N, Cin, H, W = 2, 3, 16, 16
    Cout = 48

    key = jax.random.PRNGKey(0)
    kx, kw = jax.random.split(key)
    x = jax.random.normal(kx, (N, Cin, H, W), dtype=jnp.float32)
    fan_in = Cin * 3 * 3
    bound = 1.0 / (fan_in ** 0.5)
    weight = jax.random.uniform(kw, (Cout, Cin, 3, 3), dtype=jnp.float32,
                                minval=-bound, maxval=bound)

    out = jax.block_until_ready(overlap_patch_embed(x, weight))

    # Reference uses the same bf16-rounded operands (upcast to f32) so the check isolates
    # kernel correctness from the intentional bf16 quantisation of the operands.
    x_q = x.astype(jnp.bfloat16).astype(jnp.float32)
    w_q = weight.astype(jnp.bfloat16).astype(jnp.float32)
    ref = jax.block_until_ready(_reference_conv(x_q, w_q))

    assert out.shape == (N, Cout, H, W), out.shape
    err = float(jnp.max(jnp.abs(out.astype(jnp.float32) - ref)))
    assert err < 5e-3, err

    print("KERNEL_OK")
</pallas_src>

<mosaic_0001>
module attributes {stable_mosaic.version = 11 : i64} {
  func.func @_patch_embed_kernel(%arg0: i32, %arg1: i32, %arg2: memref<48x27xbf16, #tpu.memory_space<vmem>>, %arg3: memref<1x3x384xbf16, #tpu.memory_space<vmem>>, %arg4: memref<2x256xf32, #tpu.memory_space<vmem>>, %arg5: memref<1x48x256xf32, #tpu.memory_space<vmem>>, %arg6: memref<27x256xf32, #tpu.memory_space<vmem>>) attributes {dimension_semantics = [#tpu.dimension_semantics<parallel>, #tpu.dimension_semantics<parallel>], iteration_bounds = array<i64: 2, 1>, scalar_prefetch = 0 : i64, scratch_operands = 1 : i64, tpu.core_type = #tpu.core_type<tc>, window_params = [{pipeline_mode = #tpu.pipeline_mode<synchronous>, transform_indices = @transform_0, window_bounds = array<i64: 48, 27>}, {transform_indices = @transform_1, window_bounds = array<i64: 1, 3, 384>}, {transform_indices = @transform_2, window_bounds = array<i64: 2, 256>}, {transform_indices = @transform_3, window_bounds = array<i64: 1, 48, 256>}]} {
    %c0 = arith.constant 0 : index
    %c0_0 = arith.constant 0 : index
    %0 = vector.load %arg4[%c0, %c0_0] : memref<2x256xf32, #tpu.memory_space<vmem>>, vector<1x256xf32>
    %c1 = arith.constant 1 : index
    %c0_1 = arith.constant 0 : index
    %1 = vector.load %arg4[%c1, %c0_1] : memref<2x256xf32, #tpu.memory_space<vmem>>, vector<1x256xf32>
    %c0_2 = arith.constant 0 : index
    %c0_3 = arith.constant 0 : index
    %c0_4 = arith.constant 0 : index
    %2 = vector.load %arg3[%c0_2, %c0_3, %c0_4] : memref<1x3x384xbf16, #tpu.memory_space<vmem>>, vector<1x3x256xbf16>
    %3 = vector.shape_cast %2 : vector<1x3x256xbf16> to vector<3x256xbf16>
    %4 = arith.extf %3 : vector<3x256xbf16> to vector<3x256xf32>
    %5 = vector.broadcast %0 : vector<1x256xf32> to vector<3x256xf32>
    %6 = arith.mulf %4, %5 : vector<3x256xf32>
    %c0_5 = arith.constant 0 : index
    %c0_6 = arith.constant 0 : index
    %7 = vector.load %arg6[%c0_5, %c0_6] : memref<27x256xf32, #tpu.memory_space<vmem>>, vector<3x256xf32>
    tpu.vector_store %arg6[%c0_5, %c0_6], %6 {strides = array<i32>} : memref<27x256xf32, #tpu.memory_space<vmem>>, vector<3x256xf32>,
    %c0_7 = arith.constant 0 : index
    %c0_8 = arith.constant 0 : index
    %c1_9 = arith.constant 1 : index
    %8 = vector.load %arg3[%c0_7, %c0_8, %c1_9] : memref<1x3x384xbf16, #tpu.memory_space<vmem>>, vector<1x3x256xbf16>
    %9 = vector.shape_cast %8 : vector<1x3x256xbf16> to vector<3x256xbf16>
    %10 = arith.extf %9 : vector<3x256xbf16> to vector<3x256xf32>
    %c3 = arith.constant 3 : index
    %c0_10 = arith.constant 0 : index
    %11 = vector.load %arg6[%c3, %c0_10] : memref<27x256xf32, #tpu.memory_space<vmem>>, vector<3x256xf32>
    tpu.vector_store %arg6[%c3, %c0_10], %10 {strides = array<i32>} : memref<27x256xf32, #tpu.memory_space<vmem>>, vector<3x256xf32>,
    %c0_11 = arith.constant 0 : index
    %c0_12 = arith.constant 0 : index
    %c2 = arith.constant 2 : index
    %12 = vector.load %arg3[%c0_11, %c0_12, %c2] : memref<1x3x384xbf16, #tpu.memory_space<vmem>>, vector<1x3x256xbf16>
    %13 = vector.shape_cast %12 : vector<1x3x256xbf16> to vector<3x256xbf16>
    %14 = arith.extf %13 : vector<3x256xbf16> to vector<3x256xf32>
    %15 = vector.broadcast %1 : vector<1x256xf32> to vector<3x256xf32>
    %16 = arith.mulf %14, %15 : vector<3x256xf32>
    %c6 = arith.constant 6 : index
    %c0_13 = arith.constant 0 : index
    %17 = vector.load %arg6[%c6, %c0_13] : memref<27x256xf32, #tpu.memory_space<vmem>>, vector<3x256xf32>
    tpu.vector_store %arg6[%c6, %c0_13], %16 {strides = array<i32>} : memref<27x256xf32, #tpu.memory_space<vmem>>, vector<3x256xf32>,
    %c0_14 = arith.constant 0 : index
    %c0_15 = arith.constant 0 : index
    %c16 = arith.constant 16 : index
    %18 = vector.load %arg3[%c0_14, %c0_15, %c16] : memref<1x3x384xbf16, #tpu.memory_space<vmem>>, vector<1x3x256xbf16>
    %19 = vector.shape_cast %18 : vector<1x3x256xbf16> to vector<3x256xbf16>
    %20 = arith.extf %19 : vector<3x256xbf16> to vector<3x256xf32>
    %21 = vector.broadcast %0 : vector<1x256xf32> to vector<3x256xf32>
    %22 = arith.mulf %20, %21 : vector<3x256xf32>
    %c9 = arith.constant 9 : index
    %c0_16 = arith.constant 0 : index
    %23 = vector.load %arg6[%c9, %c0_16] : memref<27x256xf32, #tpu.memory_space<vmem>>, vector<3x256xf32>
    tpu.vector_store %arg6[%c9, %c0_16], %22 {strides = array<i32>} : memref<27x256xf32, #tpu.memory_space<vmem>>, vector<3x256xf32>,
    %c0_17 = arith.constant 0 : index
    %c0_18 = arith.constant 0 : index
    %c17 = arith.constant 17 : index
    %24 = vector.load %arg3[%c0_17, %c0_18, %c17] : memref<1x3x384xbf16, #tpu.memory_space<vmem>>, vector<1x3x256xbf16>
    %25 = vector.shape_cast %24 : vector<1x3x256xbf16> to vector<3x256xbf16>
    %26 = arith.extf %25 : vector<3x256xbf16> to vector<3x256xf32>
    %c12 = arith.constant 12 : index
    %c0_19 = arith.constant 0 : index
    %27 = vector.load %arg6[%c12, %c0_19] : memref<27x256xf32, #tpu.memory_space<vmem>>, vector<3x256xf32>
    tpu.vector_store %arg6[%c12, %c0_19], %26 {strides = array<i32>} : memref<27x256xf32, #tpu.memory_space<vmem>>, vector<3x256xf32>,
    %c0_20 = arith.constant 0 : index
    %c0_21 = arith.constant 0 : index
    %c18 = arith.constant 18 : index
    %28 = vector.load %arg3[%c0_20, %c0_21, %c18] : memref<1x3x384xbf16, #tpu.memory_space<vmem>>, vector<1x3x256xbf16>
    %29 = vector.shape_cast %28 : vector<1x3x256xbf16> to vector<3x256xbf16>
    %30 = arith.extf %29 : vector<3x256xbf16> to vector<3x256xf32>
    %31 = vector.broadcast %1 : vector<1x256xf32> to vector<3x256xf32>
    %32 = arith.mulf %30, %31 : vector<3x256xf32>
    %c15 = arith.constant 15 : index
    %c0_22 = arith.constant 0 : index
    %33 = vector.load %arg6[%c15, %c0_22] : memref<27x256xf32, #tpu.memory_space<vmem>>, vector<3x256xf32>
    tpu.vector_store %arg6[%c15, %c0_22], %32 {strides = array<i32>} : memref<27x256xf32, #tpu.memory_space<vmem>>, vector<3x256xf32>,
    %c0_23 = arith.constant 0 : index
    %c0_24 = arith.constant 0 : index
    %c32 = arith.constant 32 : index
    %34 = vector.load %arg3[%c0_23, %c0_24, %c32] : memref<1x3x384xbf16, #tpu.memory_space<vmem>>, vector<1x3x256xbf16>
    %35 = vector.shape_cast %34 : vector<1x3x256xbf16> to vector<3x256xbf16>
    %36 = arith.extf %35 : vector<3x256xbf16> to vector<3x256xf32>
    %37 = vector.broadcast %0 : vector<1x256xf32> to vector<3x256xf32>
    %38 = arith.mulf %36, %37 : vector<3x256xf32>
    %c18_25 = arith.constant 18 : index
    %c0_26 = arith.constant 0 : index
    %39 = vector.load %arg6[%c18_25, %c0_26] : memref<27x256xf32, #tpu.memory_space<vmem>>, vector<3x256xf32>
    tpu.vector_store %arg6[%c18_25, %c0_26], %38 {strides = array<i32>} : memref<27x256xf32, #tpu.memory_space<vmem>>, vector<3x256xf32>,
    %c0_27 = arith.constant 0 : index
    %c0_28 = arith.constant 0 : index
    %c33 = arith.constant 33 : index
    %40 = vector.load %arg3[%c0_27, %c0_28, %c33] : memref<1x3x384xbf16, #tpu.memory_space<vmem>>, vector<1x3x256xbf16>
    %41 = vector.shape_cast %40 : vector<1x3x256xbf16> to vector<3x256xbf16>
    %42 = arith.extf %41 : vector<3x256xbf16> to vector<3x256xf32>
    %c21 = arith.constant 21 : index
    %c0_29 = arith.constant 0 : index
    %43 = vector.load %arg6[%c21, %c0_29] : memref<27x256xf32, #tpu.memory_space<vmem>>, vector<3x256xf32>
    tpu.vector_store %arg6[%c21, %c0_29], %42 {strides = array<i32>} : memref<27x256xf32, #tpu.memory_space<vmem>>, vector<3x256xf32>,
    %c0_30 = arith.constant 0 : index
    %c0_31 = arith.constant 0 : index
    %c34 = arith.constant 34 : index
    %44 = vector.load %arg3[%c0_30, %c0_31, %c34] : memref<1x3x384xbf16, #tpu.memory_space<vmem>>, vector<1x3x256xbf16>
    %45 = vector.shape_cast %44 : vector<1x3x256xbf16> to vector<3x256xbf16>
    %46 = arith.extf %45 : vector<3x256xbf16> to vector<3x256xf32>
    %47 = vector.broadcast %1 : vector<1x256xf32> to vector<3x256xf32>
    %48 = arith.mulf %46, %47 : vector<3x256xf32>
    %c24 = arith.constant 24 : index
    %c0_32 = arith.constant 0 : index
    %49 = vector.load %arg6[%c24, %c0_32] : memref<27x256xf32, #tpu.memory_space<vmem>>, vector<3x256xf32>
    tpu.vector_store %arg6[%c24, %c0_32], %48 {strides = array<i32>} : memref<27x256xf32, #tpu.memory_space<vmem>>, vector<3x256xf32>,
    %c0_33 = arith.constant 0 : index
    %c0_34 = arith.constant 0 : index
    %50 = vector.load %arg2[%c0_33, %c0_34] : memref<48x27xbf16, #tpu.memory_space<vmem>>, vector<48x27xbf16>
    %c0_35 = arith.constant 0 : index
    %c0_36 = arith.constant 0 : index
    %51 = vector.load %arg6[%c0_35, %c0_36] : memref<27x256xf32, #tpu.memory_space<vmem>>, vector<27x256xf32>
    %52 = arith.truncf %51 : vector<27x256xf32> to vector<27x256xbf16>
    %cst = arith.constant dense<0.000000e+00> : vector<48x256xf32>
    %53 = tpu.matmul %50, %52, %cst {dimension_numbers = #tpu.dot_dimension_numbers<[1], [0], [0], [1], [0, 0, 1, 1], [], []>} : vector<48x27xbf16>, vector<27x256xbf16>, vector<48x256xf32> -> vector<48x256xf32>
    %c0_37 = arith.constant 0 : index
    %c0_38 = arith.constant 0 : index
    %c0_39 = arith.constant 0 : index
    %54 = vector.load %arg5[%c0_37, %c0_38, %c0_39] : memref<1x48x256xf32, #tpu.memory_space<vmem>>, vector<1x48x256xf32>
    %55 = vector.shape_cast %54 : vector<1x48x256xf32> to vector<48x256xf32>
    %56 = vector.shape_cast %53 : vector<48x256xf32> to vector<1x48x256xf32>
    tpu.vector_store %arg5[%c0_37, %c0_38, %c0_39], %56 {strides = array<i32>} : memref<1x48x256xf32, #tpu.memory_space<vmem>>, vector<1x48x256xf32>,
    return
  }
  func.func @transform_0(%arg0: i32, %arg1: i32) -> (i32, i32) {
    %c0_i32 = arith.constant 0 : i32
    %c0_i32_0 = arith.constant 0 : i32
    %c0_i32_1 = arith.constant 0 : i32
    return %c0_i32, %c0_i32_0 : i32, i32
  }
  func.func @transform_1(%arg0: i32, %arg1: i32) -> (i32, i32, i32) {
    %c0_i32 = arith.constant 0 : i32
    %c0_i32_0 = arith.constant 0 : i32
    %c0_i32_1 = arith.constant 0 : i32
    return %arg0, %c0_i32, %c0_i32_0 : i32, i32, i32
  }
  func.func @transform_2(%arg0: i32, %arg1: i32) -> (i32, i32) {
    %c0_i32 = arith.constant 0 : i32
    %c0_i32_0 = arith.constant 0 : i32
    return %c0_i32, %arg1 : i32, i32
  }
  func.func @transform_3(%arg0: i32, %arg1: i32) -> (i32, i32, i32) {
    %c0_i32 = arith.constant 0 : i32
    %c0_i32_0 = arith.constant 0 : i32
    return %arg0, %c0_i32, %arg1 : i32, i32, i32
  }
}

</mosaic_0001>

<llo_original>
// kernel: tpu_custom_call.1
$region0: #{tpu_custom_call.1}
  #allocation0 [shape = 'u32[]', space=smem, size = 0x4, offset = 0x4, fixed_abs, tag = 'smem constant byte address 0x4 - core index']
  #allocation1 [shape = 'u32[144,128]{1,0:T(1,128)}', space=vmem, size = 0x12000, scoped, tag = 'internal scratch']
  #allocation2 [shape = 'f32[27,256]{1,0:T(8,128)}', space=vmem, size = 0x8000, scoped, tag = 'scratch operand']
  %s0 = inlined_call_operand.vmem [shape: bf16[48,27], index: 0, kind: input, shape index: {}]
  %s1 = inlined_call_operand.vmem [shape: bf16[2,3,384], index: 1, kind: input, shape index: {}]
  %s2 = inlined_call_operand.vmem [shape: f32[2,256], index: 2, kind: input, shape index: {}]
  %s3 = inlined_call_operand.hbm [shape: f32[2,48,256], index: 3, kind: output, shape index: {}]
  %s4 = sld [smem:[#allocation0]]
  $region45: #{tpu_custom_call.1} parent=0
    _
  %s6 = ssub.s32 1, %s4
  %s7 = scalar_select 0, %s6, %s4
  $region1: #{tpu_custom_call.1} parent=0
    #allocation3 [shape = 'u8[98304]{0}', space=vmem, size = 0x18000, scoped, tag = 'output window, operand 0']
    #allocation4 [shape = 's32[2]{0}', space=sflag, size = 0x8, scoped, tag = 'scoped memory for tpu_custom_call.1']
    %8 = vsyncpa [#allocation4], 0
    %s9 = scalar_lea.sflag [#allocation4], 1
    %10 = vsyncpa %s9, 0
    loop: start=0, step=1, limit=4
    $region2: #{tpu_custom_call.1} parent=1 // loop_pre_header
      _
    $region3: #{tpu_custom_call.1} parent=1 // loop_header
      %s12 = sphi 0, %s16
      %p13 = scmp.ge.s32.totalorder %s12, 4
      %s19 = sphi 0, %s31
      %s20 = sphi 0, %s27
      %s21 = sphi 0, %s19
      %s22 = sphi 0, %s20
      %s23 = sphi 0, %s21
      %s24 = sphi 0, %s22
      %s32 = sphi 0, %s32
      %s34 = sphi 0, %s32
      %s35 = sphi 0, %s34
      %s49 = sphi 0, %s35
      %s55 = sphi 0, %s57
      %s58 = sphi 0, %s55
      %s59 = sphi 0, %s58
      %s75 = sphi 0, %s59
      %s81 = sphi 0, %s83
      %s84 = sphi 0, %s81
      %s85 = sphi 0, %s84
      %s101 = sphi 0, %s85
      %s109 = sphi 0, %s111
      %s112 = sphi 0, %s109
      %s113 = sphi 0, %s112
      %s129 = sphi 0, %s113
    $region4: #{tpu_custom_call.1} parent=1 // loop_header_branch
      %15 = sbr.rel (%p13) target = $region8
    $region5: #{tpu_custom_call.1} parent=1 // loop_body
      %s17 = ssub.s32 %s12, 1
      %s18 = ssub.s32 %s12, 2
      %s25 = sadd.s32 1, %s20
      %p26 = scmp.ge.s32.totalorder %s25, 1
      %s27 = scalar_select %p26, 0, %s25
      %s28 = sadd.s32 1, %s19
      %s29 = scalar_select %p26, %s28, %s19
      %p30 = scmp.ge.s32.totalorder %s29, 2
      %s31 = scalar_select %p30, 0, %s29
      %s33 = sadd.s32 %s32, 1
      %p36 = scmp.eq.s32.totalorder %s12, 1
      %p37 = scmp.ne.s32.totalorder %s32, %s34
      %p38 = scmp.eq.s32.totalorder %s12, 0
      %p39 = por %p37, %p38
      %p40 = scmp.ne.s32.totalorder %s32, %s34
      %p41 = scmp.eq.s32.totalorder %s17, 1
      %p42 = por %p40, %p41
      %p43 = scmp.ne.s32.totalorder %s34, %s35
      %p44 = scmp.eq.s32.totalorder %s17, 0
      %p45 = por %p43, %p44
      %p46 = scmp.ne.s32.totalorder %s34, %s35
      %p47 = scmp.eq.s32.totalorder %s18, 1
      %p48 = por %p46, %p47
      %p50 = scmp.ne.s32.totalorder %s35, %s49
      %p51 = scmp.eq.s32.totalorder %s18, 0
      %p52 = por %p50, %p51
      %s53 = ssub.s32 %s19, %s31
      %p54 = scmp.eq.s32.totalorder %s53, 0
      %s56 = sadd.s32 %s55, 1
      %s57 = scalar_select %p54, %s55, %s56
      %p60 = pneg %p54
      %p61 = scmp.eq.s32.totalorder %s12, 1
      %p62 = por %p60, %p61
      %p63 = scmp.ne.s32.totalorder %s55, %s58
      %p64 = scmp.eq.s32.totalorder %s12, 0
      %p65 = por %p63, %p64
      %p66 = scmp.ne.s32.totalorder %s55, %s58
      %p67 = scmp.eq.s32.totalorder %s17, 1
      %p68 = por %p66, %p67
      %p69 = scmp.ne.s32.totalorder %s58, %s59
      %p70 = scmp.eq.s32.totalorder %s17, 0
      %p71 = por %p69, %p70
      %p72 = scmp.ne.s32.totalorder %s58, %s59
      %p73 = scmp.eq.s32.totalorder %s18, 1
      %p74 = por %p72, %p73
      %p76 = scmp.ne.s32.totalorder %s59, %s75
      %p77 = scmp.eq.s32.totalorder %s18, 0
      %p78 = por %p76, %p77
      %s79 = ssub.s32 %s20, %s27
      %p80 = scmp.eq.s32.totalorder %s79, 0
      %s82 = sadd.s32 %s81, 1
      %s83 = scalar_select %p80, %s81, %s82
      %p86 = pneg %p80
      %p87 = scmp.eq.s32.totalorder %s12, 1
      %p88 = por %p86, %p87
      %p89 = scmp.ne.s32.totalorder %s81, %s84
      %p90 = scmp.eq.s32.totalorder %s12, 0
      %p91 = por %p89, %p90
      %p92 = scmp.ne.s32.totalorder %s81, %s84
      %p93 = scmp.eq.s32.totalorder %s17, 1
      %p94 = por %p92, %p93
      %p95 = scmp.ne.s32.totalorder %s84, %s85
      %p96 = scmp.eq.s32.totalorder %s17, 0
      %p97 = por %p95, %p96
      %p98 = scmp.ne.s32.totalorder %s84, %s85
      %p99 = scmp.eq.s32.totalorder %s18, 1
      %p100 = por %p98, %p99
      %p102 = scmp.ne.s32.totalorder %s85, %s101
      %p103 = scmp.eq.s32.totalorder %s18, 0
      %p104 = por %p102, %p103
      %s105 = ssub.s32 %s19, %s31
      %s106 = ssub.s32 %s20, %s27
      %s107 = sor.u32 %s105, %s106
      %p108 = scmp.eq.s32.totalorder %s107, 0
      %s110 = sadd.s32 %s109, 1
      %s111 = scalar_select %p108, %s109, %s110
      %p114 = pneg %p108
      %p115 = scmp.eq.s32.totalorder %s12, 1
      %p116 = por %p114, %p115
      %p117 = scmp.ne.s32.totalorder %s109, %s112
      %p118 = scmp.eq.s32.totalorder %s12, 0
      %p119 = por %p117, %p118
      %p120 = scmp.ne.s32.totalorder %s109, %s112
      %p121 = scmp.eq.s32.totalorder %s17, 1
      %p122 = por %p120, %p121
      %p123 = scmp.ne.s32.totalorder %s112, %s113
      %p124 = scmp.eq.s32.totalorder %s17, 0
      %p125 = por %p123, %p124
      %p126 = scmp.ne.s32.totalorder %s112, %s113
      %p127 = scmp.eq.s32.totalorder %s18, 1
      %p128 = por %p126, %p127
      %p130 = scmp.ne.s32.totalorder %s113, %s129
      %p131 = scmp.eq.s32.totalorder %s18, 0
      %p132 = por %p130, %p131
      %p133 = scmp.le.s32.totalorder 1, %s12
      %p134 = scmp.lt.s32.totalorder %s12, 3
      %p135 = pnand %p133, %p134
      %p136 = pneg %p135
      // Predicated region
      $region9: #{tpu_custom_call.1} parent=5 // pred_check
        _
      $region10: #{tpu_custom_call.1} parent=5 // pred_check_branch
        %138 = sbr.rel (%p135) target = $region12
      $region11: #{tpu_custom_call.1} parent=5 // pred_region
        %s139 = ssub.s32 %s12, 1
        // Predicated region
        $region13: #{tpu_custom_call.1} parent=11 // pred_check
          %p140 = pneg %p45
        $region14: #{tpu_custom_call.1} parent=11 // pred_check_branch
          %142 = sbr.rel (%p140) target = $region16
        $region15: #{tpu_custom_call.1} parent=11 // pred_region
          _
        $region16: #{tpu_custom_call.1} parent=11 // pred_fallthru
          _
        // Predicated region
        $region17: #{tpu_custom_call.1} parent=11 // pred_check
          %p143 = pneg %p97
        $region18: #{tpu_custom_call.1} parent=11 // pred_check_branch
          %145 = sbr.rel (%p143) target = $region20
        $region19: #{tpu_custom_call.1} parent=11 // pred_region
          %s146 = smul.u32 2, %s22
          %p147 = scmp.lt.s32.totalorder %s146, 1
          %s148 = scalar_select %p147, %s146, 1
          %s149 = smul.addr %s148, 2
          %s150 = scalar_lea.vmem %s2, %s149
          %s151 = smul.u32 2, %s22
        $region20: #{tpu_custom_call.1} parent=11 // pred_fallthru
          _
      $region12: #{tpu_custom_call.1} parent=5 // pred_fallthru
        _
      %p152 = scmp.lt.s32.totalorder %s12, 2
      // Predicated region
      $region21: #{tpu_custom_call.1} parent=5 // pred_check
        %p153 = pneg %p152
      $region22: #{tpu_custom_call.1} parent=5 // pred_check_branch
        %155 = sbr.rel (%p153) target = $region24
      $region23: #{tpu_custom_call.1} parent=5 // pred_region
        // Predicated region
        $region25: #{tpu_custom_call.1} parent=23 // pred_check
          %p156 = pneg %p65
        $region26: #{tpu_custom_call.1} parent=23 // pred_check_branch
          %158 = sbr.rel (%p156) target = $region28
        $region27: #{tpu_custom_call.1} parent=23 // pred_region
          %p159 = scmp.lt.s32.totalorder %s19, 1
          %s160 = scalar_select %p159, %s19, 1
          %s161 = smul.addr %s160, 3
          %s162 = smul.addr %s161, 2
          %s163 = scalar_lea.vmem %s1, %s162
        $region28: #{tpu_custom_call.1} parent=23 // pred_fallthru
          _
      $region24: #{tpu_custom_call.1} parent=5 // pred_fallthru
        _
      %p164 = scmp.le.s32.totalorder 1, %s12
      %p165 = scmp.lt.s32.totalorder %s12, 3
      %p166 = pnand %p164, %p165
      %p167 = pneg %p166
      // Predicated region
      $region29: #{tpu_custom_call.1} parent=5 // pred_check
        _
      $region30: #{tpu_custom_call.1} parent=5 // pred_check_branch
        %169 = sbr.rel (%p166) target = $region32
      $region31: #{tpu_custom_call.1} parent=5 // pred_region
        %s170 = ssub.s32 %s12, 1
        %p171 = pneg %p45
        %p172 = pneg %p42
        %p173 = scmp.lt.s32.totalorder %s21, 1
        %s174 = scalar_select %p173, %s21, 1
        %s175 = smul.addr %s174, 3
        %s176 = smul.addr %s175, 2
        %s177 = scalar_lea.vmem %s1, %s176
        %p178 = pneg %p71
        %p179 = pneg %p68
        %s180 = smul.u32 2, %s22
        %p181 = scmp.lt.s32.totalorder %s180, 1
        %s182 = scalar_select %p181, %s180, 1
        %s183 = smul.addr %s182, 2
        %s184 = scalar_lea.vmem %s2, %s183
        %p185 = pneg %p97
        %p186 = pneg %p94
        %p187 = pneg %p125
        %p188 = pneg %p122
        %s189 = sand.u32 %s112, 1
        %s190 = scalar_lea.sflag [#allocation4], %s189
        %s191 = sand.u32 %s112, 1
        %s192 = smul.addr %s191, 96
        %s193 = scalar_lea.vmem [#allocation3], %s192
        %p194 = scmp.lt.s32.totalorder %s21, 1
        %s195 = scalar_select %p194, %s21, 1
        %s196 = smul.addr %s195, 3
        %s197 = smul.addr %s196, 2
        %s198 = scalar_lea.vmem %s1, %s197
        %s199 = smul.u32 2, %s22
        %p200 = scmp.lt.s32.totalorder %s199, 1
        %s201 = scalar_select %p200, %s199, 1
        %s202 = smul.addr %s201, 2
        %s203 = scalar_lea.vmem %s2, %s202
        %s204 = smul.u32 2, %s22
        %s205 = smul.u32 2, %s22
        %v207 = vld [vmem:[%s203] ss:$2 sm:$0x3]
        %s208 = scalar_lea.vmem %s203, 1
        %v209 = vld [vmem:[%s208] ss:$2 sm:$0x3]
        %v210 = vld [vmem:[%s198] sm:$0xf]
        %v211 = vunpack.c.l.bf16 %v210
        %v213 = vlaneseq
        %v214 = vshrl.u32 %v213, 7
        %v215 = vsub.s32 0, %v214
        %v216 = vrot.slane %v207, %v215
        %v217 = vlaneseq
        %v218 = vshrl.u32 %v217, 7
        %v219 = vsub.s32 1, %v218
        %v220 = vrot.slane %v207, %v219
        %v221 = vcombine.low %v216, %v220
        %v223 = vmul.f32 %v211, %v221
        %v225 = vcombine.high %v223, %v223
        %227 = vst [vmem:[#allocation2] sm:$0x7] %v223
        %228 = vst [vmem:[#allocation2 + $0x8] sm:$0x7] %v225
        %v229 = vld [vmem:[%s198] sm:$0x3f]
        %v230 = vunpack.c.l.bf16 %v229
        %v231 = vunpack.c.h.bf16 %v229
        %v234 = vcombine.high %v230, %v230
        %v235 = vrot.slane %v230, 5
        %v236 = vrot.slane %v234, 5
        %v237 = vrot.slane %v231, 5
        %238 = vrot.lane.b32.xlu0 %v235, 127
        %v239 = vpop.permute.xlu0 %238
        %240 = vrot.lane.b32.xlu0 %v236, 127
        %v241 = vpop.permute.xlu0 %240
        %242 = vrot.lane.b32.xlu0 %v237, 127
        %v243 = vpop.permute.xlu0 %242
        %vm244 = vcmask 1039360
        %v245 = vsel %vm244, %v239, %v241
        %v246 = vsel %vm244, %v241, %v243
        %249 = vst [vmem:[#allocation2] sm:$0x38] %v245
        %250 = vst [vmem:[#allocation2 + $0x8] sm:$0x38] %v246
        %v251 = vld [vmem:[%s198] sm:$0x3f]
        %v252 = vunpack.c.l.bf16 %v251
        %v253 = vunpack.c.h.bf16 %v251
        %v255 = vlaneseq
        %v256 = vshrl.u32 %v255, 7
        %v257 = vsub.s32 0, %v256
        %v258 = vrot.slane %v209, %v257
        %v259 = vlaneseq
        %v260 = vshrl.u32 %v259, 7
        %v261 = vsub.s32 1, %v260
        %v262 = vrot.slane %v209, %v261
        %v263 = vcombine.low %v258, %v262
        %264 = vrot.lane.b32.xlu0 %v263, 2
        %v265 = vpop.permute.xlu0 %264
        %v266 = vrot.slane %v265, 4
        %vm267 = vcmask 15360
        %v268 = vsel %vm267, %v266, %v265
        %v271 = vmul.f32 %v252, %v268
        %v272 = vmul.f32 %v253, %v266
        %v275 = vcombine.high %v271, %v271
        %v276 = vrot.slane %v271, 2
        %v277 = vrot.slane %v275, 2
        %v278 = vrot.slane %v272, 2
        %279 = vrot.lane.b32.xlu0 %v276, 126
        %v280 = vpop.permute.xlu0 %279
        %281 = vrot.lane.b32.xlu0 %v277, 126
        %v282 = vpop.permute.xlu0 %281
        %283 = vrot.lane.b32.xlu0 %v278, 126
        %v284 = vpop.permute.xlu0 %283
        %vm285 = vcmask 1031168
        %v286 = vsel %vm285, %v280, %v282
        %v287 = vsel %vm285, %v282, %v284
        %290 = vst [vmem:[#allocation2] sm:$0xc0] %v286
        %291 = vst [vmem:[#allocation2 + $0x8] sm:$0xc0] %v287
        %292 = vst [vmem:[#allocation2 + $0x10] sm:$0x1] %v286
        %293 = vst [vmem:[#allocation2 + $0x18] sm:$0x1] %v287
        %v294 = vld [vmem:[%s198] sm:$0x3f]
        %v295 = vunpack.c.l.bf16 %v294
        %v296 = vunpack.c.h.bf16 %v294
        %297 = vrot.lane.b32.xlu0 %v221, 16
        %v298 = vpop.permute.xlu0 %297
        %v299 = vrot.slane %v298, 4
        %vm300 = vcmask 130048
        %v301 = vsel %vm300, %v299, %v298
        %v304 = vmul.f32 %v295, %v301
        %v305 = vmul.f32 %v296, %v299
        %v308 = vcombine.high %v304, %v304
        %v309 = vrot.slane %v304, 7
        %v310 = vrot.slane %v308, 7
        %v311 = vrot.slane %v305, 7
        %312 = vrot.lane.b32.xlu0 %v309, 112
        %v313 = vpop.permute.xlu0 %312
        %314 = vrot.lane.b32.xlu0 %v310, 112
        %v315 = vpop.permute.xlu0 %314
        %316 = vrot.lane.b32.xlu0 %v311, 112
        %v317 = vpop.permute.xlu0 %316
        %vm318 = vcmask 916480
        %v319 = vsel %vm318, %v313, %v315
        %v320 = vsel %vm318, %v315, %v317
        %323 = vst [vmem:[#allocation2 + $0x10] sm:$0xe] %v319
        %324 = vst [vmem:[#allocation2 + $0x18] sm:$0xe] %v320
        %v325 = vld [vmem:[%s198] sm:$0x3f]
        %v326 = vunpack.c.l.bf16 %v325
        %v327 = vunpack.c.h.bf16 %v325
        %v330 = vcombine.low %v326, %v326
        %v331 = vcombine.low %v327, %v327
        %332 = vrot.lane.b32.xlu0 %v330, 111
        %v333 = vpop.permute.xlu0 %332
        %334 = vrot.lane.b32.xlu0 %v326, 111
        %v335 = vpop.permute.xlu0 %334
        %336 = vrot.lane.b32.xlu0 %v331, 111
        %v337 = vpop.permute.xlu0 %336
        %vm338 = vcmask 908288
        %v339 = vsel %vm338, %v333, %v335
        %v340 = vsel %vm338, %v335, %v337
        %343 = vst [vmem:[#allocation2 + $0x10] sm:$0x70] %v339
        %344 = vst [vmem:[#allocation2 + $0x18] sm:$0x70] %v340
        %v345 = vld [vmem:[%s198] sm:$0x3f]
        %v346 = vunpack.c.l.bf16 %v345
        %v347 = vunpack.c.h.bf16 %v345
        %348 = vrot.lane.b32.xlu0 %v263, 18
        %v349 = vpop.permute.xlu0 %348
        %v350 = vrot.slane %v349, 4
        %vm351 = vcmask 146432
        %v352 = vsel %vm351, %v350, %v349
        %v355 = vmul.f32 %v346, %v352
        %v356 = vmul.f32 %v347, %v350
        %v359 = vcombine.high %v355, %v355
        %v360 = vrot.slane %v355, 1
        %v361 = vrot.slane %v359, 1
        %v362 = vrot.slane %v356, 1
        %363 = vrot.lane.b32.xlu0 %v360, 110
        %v364 = vpop.permute.xlu0 %363
        %365 = vrot.lane.b32.xlu0 %v361, 110
        %v366 = vpop.permute.xlu0 %365
        %367 = vrot.lane.b32.xlu0 %v362, 110
        %v368 = vpop.permute.xlu0 %367
        %vm369 = vcmask 900096
        %v370 = vsel %vm369, %v364, %v366
        %v371 = vsel %vm369, %v366, %v368
        %374 = vst [vmem:[#allocation2 + $0x10] sm:$0x80] %v370
        %375 = vst [vmem:[#allocation2 + $0x18] sm:$0x80] %v371
        %376 = vst [vmem:[#allocation2 + $0x20] sm:$0x3] %v370
        %377 = vst [vmem:[#allocation2 + $0x28] sm:$0x3] %v371
        %v378 = vld [vmem:[%s198] sm:$0x3f]
        %v379 = vunpack.c.l.bf16 %v378
        %v380 = vunpack.c.h.bf16 %v378
        %381 = vrot.lane.b32.xlu0 %v221, 32
        %v382 = vpop.permute.xlu0 %381
        %v383 = vrot.slane %v382, 4
        %vm384 = vcmask 261120
        %v385 = vsel %vm384, %v383, %v382
        %v388 = vmul.f32 %v379, %v385
        %v389 = vmul.f32 %v380, %v383
        %v392 = vcombine.high %v388, %v388
        %v393 = vrot.slane %v388, 6
        %v394 = vrot.slane %v392, 6
        %v395 = vrot.slane %v389, 6
        %396 = vrot.lane.b32.xlu0 %v393, 96
        %v397 = vpop.permute.xlu0 %396
        %398 = vrot.lane.b32.xlu0 %v394, 96
        %v399 = vpop.permute.xlu0 %398
        %400 = vrot.lane.b32.xlu0 %v395, 96
        %v401 = vpop.permute.xlu0 %400
        %vm402 = vcmask 785408
        %v403 = vsel %vm402, %v397, %v399
        %v404 = vsel %vm402, %v399, %v401
        %407 = vst [vmem:[#allocation2 + $0x20] sm:$0x1c] %v403
        %408 = vst [vmem:[#allocation2 + $0x28] sm:$0x1c] %v404
        %v409 = vld [vmem:[%s198] sm:$0x3f]
        %v410 = vunpack.c.l.bf16 %v409
        %v411 = vunpack.c.h.bf16 %v409
        %v414 = vcombine.high %v410, %v410
        %v415 = vrot.slane %v410, 3
        %v416 = vrot.slane %v414, 3
        %v417 = vrot.slane %v411, 3
        %418 = vrot.lane.b32.xlu0 %v415, 95
        %v419 = vpop.permute.xlu0 %418
        %420 = vrot.lane.b32.xlu0 %v416, 95
        %v421 = vpop.permute.xlu0 %420
        %422 = vrot.lane.b32.xlu0 %v417, 95
        %v423 = vpop.permute.xlu0 %422
        %vm424 = vcmask 777216
        %v425 = vsel %vm424, %v419, %v421
        %v426 = vsel %vm424, %v421, %v423
        %429 = vst [vmem:[#allocation2 + $0x20] sm:$0xe0] %v425
        %430 = vst [vmem:[#allocation2 + $0x28] sm:$0xe0] %v426
        %v431 = vld [vmem:[%s198] sm:$0x3f]
        %v432 = vunpack.c.l.bf16 %v431
        %v433 = vunpack.c.h.bf16 %v431
        %434 = vrot.lane.b32.xlu0 %v263, 34
        %v435 = vpop.permute.xlu0 %434
        %v436 = vrot.slane %v435, 4
        %vm437 = vcmask 277504
        %v438 = vsel %vm437, %v436, %v435
        %v441 = vmul.f32 %v432, %v438
        %v442 = vmul.f32 %v433, %v436
        %v445 = vcombine.high %v441, %v441
        %446 = vrot.lane.b32.xlu0 %v441, 94
        %v447 = vpop.permute.xlu0 %446
        %448 = vrot.lane.b32.xlu0 %v445, 94
        %v449 = vpop.permute.xlu0 %448
        %450 = vrot.lane.b32.xlu0 %v442, 94
        %v451 = vpop.permute.xlu0 %450
        %vm452 = vcmask 769024
        %v453 = vsel %vm452, %v447, %v449
        %v454 = vsel %vm452, %v449, %v451
        %457 = vst [vmem:[#allocation2 + $0x30] sm:$0x7] %v453
        %458 = vst [vmem:[#allocation2 + $0x38] sm:$0x7] %v454
        %v459 = vld [vmem:[%s0] sm:$0xf]
        %v460 = vld [vmem:[%s0 + $0x4] sm:$0xf]
        %v461 = vld [vmem:[%s0 + $0x8] sm:$0xf]
        %v462 = vld [vmem:[%s0 + $0xc] sm:$0xf]
        %v463 = vld [vmem:[%s0 + $0x10] sm:$0xf]
        %v464 = vld [vmem:[%s0 + $0x14] sm:$0xf]
        %v465 = vld [vmem:[#allocation2] sm:$0xff]
        %v466 = vld [vmem:[#allocation2 + $0x8] sm:$0xff]
        %v467 = vld [vmem:[#allocation2 + $0x10] sm:$0xff]
        %v468 = vld [vmem:[#allocation2 + $0x18] sm:$0xff]
        %v469 = vld [vmem:[#allocation2 + $0x20] sm:$0xff]
        %v470 = vld [vmem:[#allocation2 + $0x28] sm:$0xff]
        %v471 = vld [vmem:[#allocation2 + $0x30] sm:$0x7]
        %v472 = vld [vmem:[#allocation2 + $0x38] sm:$0x7]
        %v473 = vpack.c.bf16 %v467, %v465
        %v474 = vpack.c.bf16 %v468, %v466
        %v475 = vpack.c.bf16 %v471, %v469
        %v476 = vpack.c.bf16 %v472, %v470
        %v483 = vunpack.c.l.b16 %v459
        %v484 = vunpack.c.l.b16 %v460
        %v485 = vunpack.c.l.b16 %v461
        %v486 = vunpack.c.l.b16 %v462
        %v487 = vunpack.c.l.b16 %v463
        %v488 = vunpack.c.l.b16 %v464
        %v489 = vpack.c.b16 %v484, %v483
        %v490 = vpack.c.b16 %v486, %v485
        %v491 = vpack.c.b16 %v488, %v487
        %vm492 = vcmask 220160
        %v494 = vsel %vm492, %v489, 0
        %v497 = vsel %vm492, %v490, 0
        %v500 = vsel %vm492, %v491, 0
        %vm502 = vcmask 1044480
        %vm503 = vcmask 1045504
        %v504 = vsel %vm502, 4294967295, 65535
        %v505 = vsel %vm503, %v504, 0
        %v507 = vand.u32 %v475, %v505
        %v510 = vand.u32 %v476, %v505
        %512 = vmatprep.subr.bf16.mxu0 %v474
        %513 = vmatpush1.bf16.msra.mxu0 %v473
        %514 = vmatprep.subr.bf16.mxu0 %v510
        %515 = vmatpush1.bf16.msra.mxu0 %v507
        %516 = vmatprep.subr.bf16.mxu0 0
        %517 = vmatpush1.bf16.msra.mxu0 0
        %518 = vmatprep.subr.bf16.mxu0 0
        %519 = vmatpush1.bf16.msra.mxu0 0
        %520 = vmatprep.subr.bf16.mxu0 0
        %521 = vmatpush1.bf16.msra.mxu0 0
        %522 = vmatprep.subr.bf16.mxu0 0
        %523 = vmatpush1.bf16.msra.mxu0 0
        %524 = vmatprep.subr.bf16.mxu0 0
        %525 = vmatpush1.bf16.msra.mxu0 0
        %526 = vmatprep.subr.bf16.mxu0 0
        %527 = vmatpush1.bf16.msra.mxu0 0
        %528 = vmatprep.subr.bf16.mxu0 0
        %529 = vmatpush1.bf16.msra.mxu0 0
        %530 = vmatprep.subr.bf16.mxu0 0
        %531 = vmatpush1.bf16.msra.mxu0 0
        %532 = vmatprep.subr.bf16.mxu0 0
        %533 = vmatpush1.bf16.msra.mxu0 0
        %534 = vmatprep.subr.bf16.mxu0 0
        %535 = vmatpush1.bf16.msra.mxu0 0
        %536 = vmatprep.subr.bf16.mxu0 0
        %537 = vmatpush1.bf16.msra.mxu0 0
        %538 = vmatprep.subr.bf16.mxu0 0
        %539 = vmatpush1.bf16.msra.mxu0 0
        %540 = vmatprep.subr.bf16.mxu0 0
        %541 = vmatpush1.bf16.msra.mxu0 0
        %542 = vmatprep.subr.bf16.mxu0 0
        %543 = vmatpush1.bf16.msra.mxu0 0
        %544 = vmatprep.mubr.bf16.mxu0 0
        %545 = vmatmul.mubr.bf16.gmra.mrb[0].mxu0 %v494
        %v546 = vpop.f32.mrb[0].mxu0
        %v547 = vadd.f32 0.0, %v546
        %v548 = vpop.f32.mrb[0].mxu0
        %v549 = vadd.f32 0.0, %v548
        %v550 = vpop.f32.mrb[0].mxu0
        %v551 = vadd.f32 0.0, %v550
        %v552 = vpop.f32.mrb[0].mxu0
        %v553 = vadd.f32 0.0, %v552
        %554 = vmatprep.mubr.bf16.mxu0 0
        %555 = vmatmul.mubr.bf16.gmra.mrb[0].mxu0 %v497
        %v556 = vpop.f32.mrb[0].mxu0
        %v557 = vadd.f32 0.0, %v556
        %v558 = vpop.f32.mrb[0].mxu0
        %v559 = vadd.f32 0.0, %v558
        %v560 = vpop.f32.mrb[0].mxu0
        %v561 = vadd.f32 0.0, %v560
        %v562 = vpop.f32.mrb[0].mxu0
        %v563 = vadd.f32 0.0, %v562
        %564 = vmatprep.mubr.bf16.mxu0 0
        %565 = vmatmul.mubr.bf16.gmra.mrb[0].mxu0 %v500
        %v566 = vpop.f32.mrb[0].mxu0
        %v567 = vadd.f32 0.0, %v566
        %v568 = vpop.f32.mrb[0].mxu0
        %v569 = vadd.f32 0.0, %v568
        %v570 = vpop.f32.mrb[0].mxu0
        %v571 = vadd.f32 0.0, %v570
        %v572 = vpop.f32.mrb[0].mxu0
        %v573 = vadd.f32 0.0, %v572
        %574 = vdwg.mxu0
        %575 = vst [vmem:[%s193] sm:$0xff] %v547
        %576 = vst [vmem:[%s193 + $0x8] sm:$0xff] %v549
        %577 = vst [vmem:[%s193 + $0x10] sm:$0xff] %v551
        %578 = vst [vmem:[%s193 + $0x18] sm:$0xff] %v553
        %579 = vst [vmem:[%s193 + $0x20] sm:$0xff] %v557
        %580 = vst [vmem:[%s193 + $0x28] sm:$0xff] %v559
        %581 = vst [vmem:[%s193 + $0x30] sm:$0xff] %v561
        %582 = vst [vmem:[%s193 + $0x38] sm:$0xff] %v563
        %583 = vst [vmem:[%s193 + $0x40] sm:$0xff] %v567
        %584 = vst [vmem:[%s193 + $0x48] sm:$0xff] %v569
        %585 = vst [vmem:[%s193 + $0x50] sm:$0xff] %v571
        %586 = vst [vmem:[%s193 + $0x58] sm:$0xff] %v573
        %s587 = sand.u32 %s112, 1
        %s588 = scalar_lea.sflag [#allocation4], %s587
        %s589 = sand.u32 %s112, 1
        %s590 = smul.addr %s589, 96
        %s591 = scalar_lea.vmem [#allocation3], %s590
        // Predicated region
        $region33: #{tpu_custom_call.1} parent=31 // pred_check
          %p592 = pneg %p122
        $region34: #{tpu_custom_call.1} parent=31 // pred_check_branch
          %594 = sbr.rel (%p592) target = $region36
        $region35: #{tpu_custom_call.1} parent=31 // pred_region
          %s595 = smul.u32 2, %s22
          %s597 = ssub.s32 1536, 1536
          %598 = vsyncadd %s588, %s597
          %s599 = smul.addr %s21, 12
          %s600 = sadd.s32 %s595, %s599
          %s601 = smul.addr %s600, 128
          %s602 = scalar_lea.hbm %s3, %s601
          %s603 = sshll.u32 %s591, 4
          %s604 = int_to_ptr.vmem [resolvable:$true] %s603
          %609 = dma.vmem_to_hbm [thread:$0]  %s604, 1536, %s602, %s588, 256, 256, 16
        $region36: #{tpu_custom_call.1} parent=31 // pred_fallthru
          _
      $region32: #{tpu_custom_call.1} parent=5 // pred_fallthru
        _
      %p610 = scmp.le.s32.totalorder 2, %s12
      // Predicated region
      $region37: #{tpu_custom_call.1} parent=5 // pred_check
        %p611 = pneg %p610
      $region38: #{tpu_custom_call.1} parent=5 // pred_check_branch
        %613 = sbr.rel (%p611) target = $region40
      $region39: #{tpu_custom_call.1} parent=5 // pred_region
        %s614 = ssub.s32 %s12, 2
        // Predicated region
        $region41: #{tpu_custom_call.1} parent=39 // pred_check
          %p615 = pneg %p128
        $region42: #{tpu_custom_call.1} parent=39 // pred_check_branch
          %617 = sbr.rel (%p615) target = $region44
        $region43: #{tpu_custom_call.1} parent=39 // pred_region
          %s618 = sand.u32 %s113, 1
          %s619 = scalar_lea.sflag [#allocation4], %s618
          %s620 = sand.u32 %s113, 1
          %s621 = smul.addr %s620, 96
          %s622 = scalar_lea.vmem [#allocation3], %s621
          %623 = dma.done %s619, 1536
        $region44: #{tpu_custom_call.1} parent=39 // pred_fallthru
          _
      $region40: #{tpu_custom_call.1} parent=5 // pred_fallthru
        _
    $region6: #{tpu_custom_call.1} parent=1 // loop_footer
      %s16 = sadd.s32 1, %s12
    $region7: #{tpu_custom_call.1} parent=1 // loop_footer_branch
      %11 = sbr.rel target = $region3
    $region8: #{tpu_custom_call.1} parent=1 // loop_exit
      _
    %624 = vsyncpa [#allocation4], 1
    %s625 = scalar_lea.sflag [#allocation4], 1
    %626 = vsyncpa %s625, 1

</llo_original>
